<compile_context>
chip_gen: v7x
topology: tpu7x:2x2x1
jax: 0.10.0
libtpu: 0.0.40
codegen_flags: <defaults>
</compile_context>

<pallas_src>
import jax
import jax.numpy as jnp
from jax.experimental import pallas as pl
from jax.experimental.pallas import tpu as pltpu


_LANE = 128


def _softmax_rows_kernel(x_ref, o_ref):
    """Row-wise softmax over the last (lane) axis of a (tile_rows, L) block.

    Padded lanes (set to a huge negative value by the wrapper) give exp == 0,
    so they contribute nothing to the sum and no in-kernel masking is needed.
    """
    x = x_ref[...].astype(jnp.float32)                  # load + promote once
    m = jnp.max(x, axis=-1, keepdims=True)              # XLU cross-lane reduce
    e = jnp.exp(x - m)                                  # EUP: one exp / element
    s = jnp.sum(e, axis=-1, keepdims=True)              # XLU cross-lane reduce
    # EUP approximate reciprocal + one Newton step on the tiny (rows, 1)
    # column: keeps the divide off the VPU, restores ~exact f32 accuracy.
    inv = pl.reciprocal(s, approx=True)
    inv = inv * (2.0 - s * inv)
    o_ref[...] = (e * inv).astype(o_ref.dtype)          # lane-dense store


def _sublane_multiple(dtype) -> int:
    """Sublane packing granularity: 8 (4-byte), 16 (2-byte), 32 (1-byte)."""
    itemsize = jnp.dtype(dtype).itemsize
    return max(8, 32 // max(itemsize, 1))


def _vmem_capacity_bytes() -> int:
    """Per-TensorCore VMEM capacity; conservative fallback if not queryable."""
    try:
        return int(pltpu.get_tpu_info().vmem_capacity_bytes)
    except Exception:
        return 64 << 20  # v7x per-TC VMEM — safe lower bound for v5e/v6e too


def _plan_tiles(rows: int, spatial_padded: int, dtype) -> tuple[int, int]:
    """Pick (block_rows, vmem_limit_bytes) from the true live-VMEM footprint.

    Footprint per grid step =
        2x double-buffered input block  (input dtype)
      + 2x double-buffered output block (same dtype)
      + ~2 block-sized f32 temporaries inside the kernel (promoted x, exp(x))
    """
    itemsize = jnp.dtype(dtype).itemsize
    per_elem = (2 * itemsize) + (2 * itemsize) + (2 * 4)
    per_row = max(spatial_padded * per_elem, 1)

    capacity = _vmem_capacity_bytes()
    # Total-footprint budget: large enough that each block is multi-MiB
    # (HBM-roofline knee), yet well under the scoped VMEM on every chip gen.
    budget = min(24 << 20, capacity // 3)

    sub = _sublane_multiple(dtype)
    tr = budget // per_row
    # Keep >= 2 grid steps when possible so the "parallel" axis can shard
    # across v7x's two TensorCores.
    if rows >= 2 * sub:
        tr = min(tr, pl.cdiv(rows, 2))
    if tr >= rows:
        tr = rows                                  # single full block (legal)
    else:
        tr = max(sub, (tr // sub) * sub)           # sublane-multiple tile
    tr = min(tr, rows)

    footprint = tr * per_row
    vmem_limit = max(32 << 20, footprint + (footprint // 2) + (4 << 20))
    vmem_limit = min(vmem_limit, capacity)
    return int(tr), int(vmem_limit)


@jax.jit
def channel_norm(featmap):
    """Forward pass of ChannelNorm: softmax over the flattened spatial dim."""
    n, c, h, w = featmap.shape
    spatial = h * w
    rows = n * c

    x2 = featmap.reshape(rows, spatial)

    # Lane-dense padding of the spatial (lane) axis to a multiple of 128.
    spatial_padded = ((spatial + _LANE - 1) // _LANE) * _LANE
    if spatial_padded != spatial:
        pad_val = jnp.finfo(featmap.dtype).min       # exp(pad - max) == 0
        x2 = jnp.pad(x2, ((0, 0), (0, spatial_padded - spatial)),
                     constant_values=pad_val)

    block_rows, vmem_limit = _plan_tiles(rows, spatial_padded, x2.dtype)
    grid = (pl.cdiv(rows, block_rows),)
    # TODO(synk): if h*w is so large that even a single sublane-height f32
    # block blows the VMEM limit (hit ~2x earlier on v7x's 64 MiB/TC), add a
    # second grid axis over the spatial dim with a streaming two-pass
    # (max then sum) softmax.

    itemsize = jnp.dtype(featmap.dtype).itemsize
    cost = pl.CostEstimate(
        flops=5 * rows * spatial_padded,
        transcendentals=rows * spatial_padded,
        bytes_accessed=2 * rows * spatial_padded * itemsize,
    )

    out = pl.pallas_call(
        _softmax_rows_kernel,
        out_shape=jax.ShapeDtypeStruct((rows, spatial_padded), featmap.dtype),
        grid_spec=pltpu.PrefetchScalarGridSpec(
            num_scalar_prefetch=0,
            grid=grid,
            in_specs=[pl.BlockSpec((block_rows, spatial_padded),
                                   lambda i: (i, 0))],
            out_specs=pl.BlockSpec((block_rows, spatial_padded),
                                   lambda i: (i, 0)),
        ),
        compiler_params=pltpu.CompilerParams(
            dimension_semantics=("parallel",),
            vmem_limit_bytes=vmem_limit,
        ),
        cost_estimate=cost,
    )(x2)

    if spatial_padded != spatial:
        out = out[:, :spatial]
    return out.reshape(n, c, spatial)


def _reference(featmap):
    n, c, h, w = featmap.shape
    return jax.nn.softmax(featmap.reshape(n, c, h * w).astype(jnp.float32),
                          axis=-1).astype(featmap.dtype)


if __name__ == "__main__":
    key = jax.random.PRNGKey(0)
    x = jax.random.normal(key, (2, 4, 16, 16), dtype=jnp.float32)

    out = channel_norm(x)
    jax.block_until_ready(out)

    ref = _reference(x)
    assert out.shape == (2, 4, 16 * 16), out.shape
    assert jnp.allclose(out, ref, rtol=1e-4, atol=1e-6), float(
        jnp.max(jnp.abs(out - ref)))
    # every row of the softmax must sum to 1
    assert jnp.allclose(jnp.sum(out, axis=-1), 1.0, rtol=1e-4, atol=1e-4)
    print("KERNEL_OK")
</pallas_src>

<mosaic_0001>
module attributes {stable_mosaic.version = 11 : i64} {
  func.func @_softmax_rows_kernel(%arg0: i32, %arg1: memref<8x256xf32, #tpu.memory_space<vmem>>, %arg2: memref<8x256xf32, #tpu.memory_space<vmem>>) attributes {dimension_semantics = [#tpu.dimension_semantics<parallel>], iteration_bounds = array<i64: 1>, scalar_prefetch = 0 : i64, scratch_operands = 0 : i64, tpu.core_type = #tpu.core_type<tc>, window_params = [{transform_indices = @transform_0, window_bounds = array<i64: 8, 256>}, {transform_indices = @transform_1, window_bounds = array<i64: 8, 256>}]} {
    %c0 = arith.constant 0 : index
    %c0_0 = arith.constant 0 : index
    %0 = vector.load %arg1[%c0, %c0_0] : memref<8x256xf32, #tpu.memory_space<vmem>>, vector<8x256xf32>
    %cst = arith.constant dense<0xFF800000> : vector<8xf32>
    %1 = vector.multi_reduction <maximumf>, %0, %cst [1] : vector<8x256xf32> to vector<8xf32>
    %2 = vector.shape_cast %1 : vector<8xf32> to vector<8x1xf32>
    %3 = vector.broadcast %2 : vector<8x1xf32> to vector<8x256xf32>
    %4 = arith.subf %0, %3 : vector<8x256xf32>
    %5 = math.exp %4 : vector<8x256xf32>
    %cst_1 = arith.constant dense<0.000000e+00> : vector<8xf32>
    %6 = vector.multi_reduction <add>, %5, %cst_1 [1] : vector<8x256xf32> to vector<8xf32>
    %7 = vector.shape_cast %6 : vector<8xf32> to vector<8x1xf32>
    %8 = tpu.reciprocal %7 {approx = true} : vector<8x1xf32> -> vector<8x1xf32>
    %9 = arith.mulf %7, %8 : vector<8x1xf32>
    %cst_2 = arith.constant 2.000000e+00 : f32
    %10 = vector.broadcast %cst_2 : f32 to vector<8x1xf32>
    %11 = arith.subf %10, %9 : vector<8x1xf32>
    %12 = arith.mulf %8, %11 : vector<8x1xf32>
    %13 = vector.broadcast %12 : vector<8x1xf32> to vector<8x256xf32>
    %14 = arith.mulf %5, %13 : vector<8x256xf32>
    %c0_3 = arith.constant 0 : index
    %c0_4 = arith.constant 0 : index
    %15 = vector.load %arg2[%c0_3, %c0_4] : memref<8x256xf32, #tpu.memory_space<vmem>>, vector<8x256xf32>
    tpu.vector_store %arg2[%c0_3, %c0_4], %14 {strides = array<i32>} : memref<8x256xf32, #tpu.memory_space<vmem>>, vector<8x256xf32>,
    return
  }
  func.func @transform_0(%arg0: i32) -> (i32, i32) {
    %c0_i32 = arith.constant 0 : i32
    %c0_i32_0 = arith.constant 0 : i32
    return %arg0, %c0_i32 : i32, i32
  }
  func.func @transform_1(%arg0: i32) -> (i32, i32) {
    %c0_i32 = arith.constant 0 : i32
    %c0_i32_0 = arith.constant 0 : i32
    return %arg0, %c0_i32 : i32, i32
  }
}

</mosaic_0001>

<llo_original>
// kernel: channel_norm.1
$region0: #{channel_norm.1}
  #allocation0 [shape = 'u32[]', space=smem, size = 0x4, offset = 0x4, fixed_abs, tag = 'smem constant byte address 0x4 - core index']
  #allocation1 [shape = 'u32[144,128]{1,0:T(1,128)}', space=vmem, size = 0x12000, scoped, tag = 'internal scratch']
  %s0 = inlined_call_operand.vmem [shape: f32[8,256], index: 0, kind: input, shape index: {}]
  %s1 = inlined_call_operand.vmem [shape: f32[8,256], index: 1, kind: output, shape index: {}]
  %s2 = sld [smem:[#allocation0]]
  $region14: #{channel_norm.1} parent=0
    _
  %s4 = ssub.s32 1, %s2
  %s5 = scalar_select 0, %s4, %s2
  // Predicated region
  $region2: #{channel_norm.1} parent=0 // pred_check
    _
  $region3: #{channel_norm.1} parent=0 // pred_check_branch
    %7 = sbr.rel (0) target = $region5
  $region4: #{channel_norm.1} parent=0 // pred_region
    _
  $region5: #{channel_norm.1} parent=0 // pred_fallthru
    _
  %v8 = vld [vmem:[%s0] sm:$0xff]
  %v9 = vld [vmem:[%s0 + $0x8] sm:$0xff]
  %v10 = vmax.f32 %v8, %v9
  %11 = vmax.xlane.f32.xlu0 %v10
  %v12 = vpop.xlane.xlu0 %11
  %v13 = vsub.f32 %v8, %v12
  %v14 = vsub.f32 %v9, %v12
  %v15 = vmul.f32 %v13, 1.442695
  %v16 = vpow.pop %v15
  %v17 = vmul.f32 %v14, 1.442695
  %v18 = vpow.pop %v17
  %v19 = vadd.f32 %v16, %v18
  %20 = vadd.xlane.f32.xlu0 %v19
  %v21 = vpop.xlane.xlu0 %20
  %v22 = vrcp.pop %v21
  %v23 = vmul.f32 %v21, %v22
  %v24 = vsub.f32 2.0, %v23
  %v25 = vmul.f32 %v22, %v24
  %v26 = vmul.f32 %v16, %v25
  %v27 = vmul.f32 %v18, %v25
  %28 = vst [vmem:[%s1] sm:$0xff] %v26
  %29 = vst [vmem:[%s1 + $0x8] sm:$0xff] %v27
  // Predicated region
  $region6: #{channel_norm.1} parent=0 // pred_check
    _
  $region7: #{channel_norm.1} parent=0 // pred_check_branch
    %31 = sbr.rel (0) target = $region9
  $region8: #{channel_norm.1} parent=0 // pred_region
    _
  $region9: #{channel_norm.1} parent=0 // pred_fallthru
    _
  // Predicated region
  $region10: #{channel_norm.1} parent=0 // pred_check
    _
  $region11: #{channel_norm.1} parent=0 // pred_check_branch
    %33 = sbr.rel (0) target = $region13
  $region12: #{channel_norm.1} parent=0 // pred_region
    _
  $region13: #{channel_norm.1} parent=0 // pred_fallthru
    _

</llo_original>
